<compile_context>
chip_gen: v5e
topology: v5e:2x2
jax: 0.10.0
libtpu: 0.0.40
codegen_flags: <defaults>
</compile_context>

<pallas_src>
import functools

import jax
import jax.numpy as jnp
from jax.experimental import pallas as pl
from jax.experimental.pallas import tpu as pltpu


def _round_up(x: int, m: int) -> int:
    return ((x + m - 1) // m) * m


def _vmem_limit_bytes() -> int:
    """Scoped-VMEM limit derived from physical VMEM (generation-aware)."""
    try:
        phys = int(pltpu.get_tpu_info().vmem_capacity_bytes)
    except Exception:
        phys = 64 * 1024 * 1024          # conservative (v7x-sized) fallback
    return min(phys // 2, 64 * 1024 * 1024)


def _pick_tiles(b: int, d_pad: int, c_pad: int, x_itemsize: int, budget: int):
    """Choose (tm, b_pad, tn, tk) under a double-buffered VMEM budget."""
    # --- batch tile (sublane axis) ---
    if b <= 256:
        tm, b_pad = b, b                  # block == full dim -> no batch pad
    else:
        tm = 512 if b >= 1024 else 256
        b_pad = _round_up(b, tm)

    # --- class tile (lane axis) ---
    tn = 256 if c_pad % 256 == 0 else 128
    # v7x has 2 TensorCores: ensure at least one parallel axis has >= 2 blocks
    # when the shape allows it.
    if c_pad // tn == 1 and b_pad // tm == 1:
        if tn == 256:
            tn = 128                      # two 128-lane class blocks
        elif b >= 16 and b % 16 == 0:
            tm = b // 2                   # two batch blocks (tm % 8 == 0)

    # --- K tile: biggest 128-multiple dividing d_pad that fits the budget ---
    tk = 128
    for cand in (2048, 1024, 512, 256, 128):
        if d_pad % cand:
            continue
        foot = (2 * (tm * cand * x_itemsize + cand * tn * 2 + tn * 4)
                + 2 * tm * tn * 4)
        if foot <= budget:
            tk = cand
            break
    return tm, b_pad, tn, tk


def _geo_classifier_single_shot_kernel(x_ref, w_ref, b_ref, o_ref):
    # Fast path: whole reduction in one shot (no k axis, no accumulator).
    x = jnp.maximum(x_ref[...], 0.0).astype(w_ref.dtype)   # ReLU in f32, cast for MXU
    o_ref[...] = (jnp.dot(x, w_ref[...], preferred_element_type=jnp.float32)
                  + b_ref[...]).astype(o_ref.dtype)


def _geo_classifier_kgrid_kernel(x_ref, w_ref, b_ref, o_ref):
    # o_ref's block index (i, j) is k-invariant -> it stays resident in VMEM
    # across the (innermost, "arbitrary") k axis; accumulate into it directly.
    k = pl.program_id(2)

    @pl.when(k == 0)
    def _init():
        o_ref[...] = jnp.zeros_like(o_ref)

    x = jnp.maximum(x_ref[...], 0.0).astype(w_ref.dtype)   # ReLU in f32, cast for MXU
    o_ref[...] += jnp.dot(x, w_ref[...], preferred_element_type=jnp.float32)

    @pl.when(k == pl.num_programs(2) - 1)
    def _flush():
        o_ref[...] += b_ref[...]


def prepare_geo_classifier_params(weight, bias, *, param_dtype=jnp.bfloat16):
    """One-time parameter preparation (outside the per-call forward).

    weight: [num_classes, D]  (PyTorch nn.Linear convention)
    bias:   [num_classes]
    Returns (w_t [D_pad, C_pad] bf16, bias_row [1, C_pad] f32, num_classes).
    Zero padding -> padded rows/cols contribute nothing to the matmul.
    """
    num_classes, d = weight.shape
    c_pad = _round_up(num_classes, 128)   # lane-dense output tiles
    d_pad = _round_up(d, 128)             # clean K tiling

    w_t = jnp.transpose(weight)                                   # [D, C], once
    w_t = jnp.pad(w_t, ((0, d_pad - d), (0, c_pad - num_classes)))
    b_row = jnp.pad(bias, (0, c_pad - num_classes)).reshape(1, c_pad)
    return w_t.astype(param_dtype), b_row.astype(jnp.float32), num_classes


@functools.partial(jax.jit, static_argnames=("num_classes", "slice_output"))
def geo_classifier_forward(x, w_t, bias_row, num_classes, slice_output=True):
    """Forward pass of GeoClassifier: ReLU -> Linear.

    x:        [B, D] or [B, C, H, W] (flattened like x.view(B, -1)); any float
              dtype, streamed as-is (no wrapper-side cast pass).
    w_t:      [D_pad, C_pad] bf16 (from prepare_geo_classifier_params)
    bias_row: [1, C_pad] f32
    returns   [B, num_classes] f32  (or the padded [b_pad, C_pad] slab when
              slice_output=False, skipping the post-call slice copy).
    """
    if x.ndim > 2:
        x = x.reshape(x.shape[0], -1)
    b, d = x.shape
    d_pad, c_pad = w_t.shape

    vmem_limit = _vmem_limit_bytes()
    tm, b_pad, tn, tk = _pick_tiles(b, d_pad, c_pad, x.dtype.itemsize,
                                    (vmem_limit * 3) // 4)

    pad_b, pad_d = b_pad - b, d_pad - d
    if pad_b or pad_d:                    # only pad when actually needed
        x = jnp.pad(x, ((0, pad_b), (0, pad_d)))

    cost = pl.CostEstimate(
        flops=2 * b_pad * d_pad * c_pad,
        transcendentals=0,
        bytes_accessed=(b_pad * d_pad * x.dtype.itemsize
                        + d_pad * c_pad * w_t.dtype.itemsize
                        + c_pad * 4
                        + b_pad * c_pad * 4))

    if d_pad <= tk:
        # ---- single-shot fast path: 2-D grid, no reduction scaffolding ----
        grid_spec = pltpu.PrefetchScalarGridSpec(
            num_scalar_prefetch=0,
            grid=(b_pad // tm, c_pad // tn),
            in_specs=[
                pl.BlockSpec((tm, d_pad), lambda i, j: (i, 0)),   # x
                pl.BlockSpec((d_pad, tn), lambda i, j: (0, j)),   # weight
                pl.BlockSpec((1, tn), lambda i, j: (0, j)),       # bias
            ],
            out_specs=pl.BlockSpec((tm, tn), lambda i, j: (i, j)),
        )
        kernel = _geo_classifier_single_shot_kernel
        semantics = ("parallel", "parallel")
    else:
        # ---- tiled reduction: k innermost + "arbitrary", accumulate in o ----
        grid_spec = pltpu.PrefetchScalarGridSpec(
            num_scalar_prefetch=0,
            grid=(b_pad // tm, c_pad // tn, d_pad // tk),
            in_specs=[
                pl.BlockSpec((tm, tk), lambda i, j, k: (i, k)),   # x
                pl.BlockSpec((tk, tn), lambda i, j, k: (k, j)),   # weight
                pl.BlockSpec((1, tn), lambda i, j, k: (0, j)),    # bias
            ],
            out_specs=pl.BlockSpec((tm, tn), lambda i, j, k: (i, j)),
        )
        kernel = _geo_classifier_kgrid_kernel
        semantics = ("parallel", "parallel", "arbitrary")

    out = pl.pallas_call(
        kernel,
        out_shape=jax.ShapeDtypeStruct((b_pad, c_pad), jnp.float32),
        grid_spec=grid_spec,
        compiler_params=pltpu.CompilerParams(
            dimension_semantics=semantics,
            vmem_limit_bytes=vmem_limit,
        ),
        cost_estimate=cost,
    )(x, w_t, bias_row)

    if slice_output:
        out = out[:b, :num_classes]
    return out


if __name__ == "__main__":
    # Module defaults: input_dim=128, num_classes=100.
    # Conv-backbone-style input [2, 8, 4, 4] (8*4*4 == 128) exercises the
    # flatten (x.dim() > 2) path.
    input_dim = 128
    num_classes = 100
    key = jax.random.PRNGKey(0)
    kx, kw, kb = jax.random.split(key, 3)

    x = jax.random.normal(kx, (2, 8, 4, 4), dtype=jnp.float32)
    weight = jax.random.normal(kw, (num_classes, input_dim), dtype=jnp.float32) * 0.02
    bias = jax.random.normal(kb, (num_classes,), dtype=jnp.float32) * 0.01

    w_t, b_row, nc = prepare_geo_classifier_params(weight, bias)
    out = geo_classifier_forward(x, w_t, b_row, nc)
    out = jax.block_until_ready(out)

    # Reference with matching operand precision: ReLU in f32, then bf16
    # operands into the matmul with f32 accumulation (what the kernel does).
    x_flat = x.reshape(x.shape[0], -1)
    x_relu = jnp.maximum(x_flat, 0.0)
    x_bf = x_relu.astype(jnp.bfloat16).astype(jnp.float32)
    w_bf = weight.astype(jnp.bfloat16).astype(jnp.float32)
    ref = x_bf @ w_bf.T + bias

    assert out.shape == (2, num_classes), out.shape
    assert jnp.allclose(out, ref, atol=2e-3, rtol=2e-3), \
        float(jnp.max(jnp.abs(out - ref)))

    print("KERNEL_OK")
</pallas_src>

<mosaic_0001>
module attributes {stable_mosaic.version = 11 : i64} {
  func.func @_geo_classifier_single_shot_kernel(%arg0: i32, %arg1: i32, %arg2: memref<2x128xf32, #tpu.memory_space<vmem>>, %arg3: memref<128x128xbf16, #tpu.memory_space<vmem>>, %arg4: memref<1x128xf32, #tpu.memory_space<vmem>>, %arg5: memref<2x128xf32, #tpu.memory_space<vmem>>) attributes {dimension_semantics = [#tpu.dimension_semantics<parallel>, #tpu.dimension_semantics<parallel>], iteration_bounds = array<i64: 1, 1>, scalar_prefetch = 0 : i64, scratch_operands = 0 : i64, tpu.core_type = #tpu.core_type<tc>, window_params = [{transform_indices = @transform_0, window_bounds = array<i64: 2, 128>}, {transform_indices = @transform_1, window_bounds = array<i64: 128, 128>}, {transform_indices = @transform_2, window_bounds = array<i64: 1, 128>}, {transform_indices = @transform_3, window_bounds = array<i64: 2, 128>}]} {
    %c0 = arith.constant 0 : index
    %c0_0 = arith.constant 0 : index
    %0 = vector.load %arg2[%c0, %c0_0] : memref<2x128xf32, #tpu.memory_space<vmem>>, vector<2x128xf32>
    %cst = arith.constant 0.000000e+00 : f32
    %1 = vector.broadcast %cst : f32 to vector<2x128xf32>
    %2 = arith.maximumf %0, %1 : vector<2x128xf32>
    %3 = arith.truncf %2 : vector<2x128xf32> to vector<2x128xbf16>
    %c0_1 = arith.constant 0 : index
    %c0_2 = arith.constant 0 : index
    %4 = vector.load %arg3[%c0_1, %c0_2] : memref<128x128xbf16, #tpu.memory_space<vmem>>, vector<128x128xbf16>
    %cst_3 = arith.constant dense<0.000000e+00> : vector<2x128xf32>
    %5 = tpu.matmul %3, %4, %cst_3 {dimension_numbers = #tpu.dot_dimension_numbers<[1], [0], [0], [1], [0, 0, 1, 1], [], []>} : vector<2x128xbf16>, vector<128x128xbf16>, vector<2x128xf32> -> vector<2x128xf32>
    %c0_4 = arith.constant 0 : index
    %c0_5 = arith.constant 0 : index
    %6 = vector.load %arg4[%c0_4, %c0_5] : memref<1x128xf32, #tpu.memory_space<vmem>>, vector<1x128xf32>
    %7 = vector.broadcast %6 : vector<1x128xf32> to vector<2x128xf32>
    %8 = arith.addf %5, %7 : vector<2x128xf32>
    %c0_6 = arith.constant 0 : index
    %c0_7 = arith.constant 0 : index
    %9 = vector.load %arg5[%c0_6, %c0_7] : memref<2x128xf32, #tpu.memory_space<vmem>>, vector<2x128xf32>
    tpu.vector_store %arg5[%c0_6, %c0_7], %8 {strides = array<i32>} : memref<2x128xf32, #tpu.memory_space<vmem>>, vector<2x128xf32>,
    return
  }
  func.func @transform_0(%arg0: i32, %arg1: i32) -> (i32, i32) {
    %c0_i32 = arith.constant 0 : i32
    %c0_i32_0 = arith.constant 0 : i32
    return %arg0, %c0_i32 : i32, i32
  }
  func.func @transform_1(%arg0: i32, %arg1: i32) -> (i32, i32) {
    %c0_i32 = arith.constant 0 : i32
    %c0_i32_0 = arith.constant 0 : i32
    return %c0_i32, %arg1 : i32, i32
  }
  func.func @transform_2(%arg0: i32, %arg1: i32) -> (i32, i32) {
    %c0_i32 = arith.constant 0 : i32
    %c0_i32_0 = arith.constant 0 : i32
    return %c0_i32, %arg1 : i32, i32
  }
  func.func @transform_3(%arg0: i32, %arg1: i32) -> (i32, i32) {
    %c0_i32 = arith.constant 0 : i32
    return %arg0, %arg1 : i32, i32
  }
}

</mosaic_0001>

<llo_original>
// kernel: geo_classifier_forward.1
$region0: #{geo_classifier_forward.1}
  #allocation0 [shape = 'u32[]', space=smem, size = 0x4, offset = 0x4, fixed_abs, tag = 'smem constant byte address 0x4 - core index']
  #allocation1 [shape = 'u32[72,128]{1,0:T(1,128)}', space=vmem, size = 0x9000, scoped, tag = 'internal scratch']
  %s0 = inlined_call_operand.vmem [shape: f32[2,128], index: 0, kind: input, shape index: {}]
  %s1 = inlined_call_operand.vmem [shape: bf16[128,128], index: 1, kind: input, shape index: {}]
  %s2 = inlined_call_operand.vmem [shape: f32[1,128], index: 2, kind: input, shape index: {}]
  %s3 = inlined_call_operand.hbm [shape: f32[2,128], index: 3, kind: output, shape index: {}]
  %s4 = sld [smem:[#allocation0]]
  $region22: #{geo_classifier_forward.1} parent=0
    _
  %s6 = ssub.s32 1, %s4
  %s7 = scalar_select 0, %s6, %s4
  $region1: #{geo_classifier_forward.1} parent=0
    #allocation2 [shape = 'u8[1024]{0}', space=vmem, size = 0x400, scoped, tag = 'output window, operand 0, single buffered']
    #allocation3 [shape = 's32[1]{0}', space=sflag, size = 0x4, scoped, tag = 'scoped memory for geo_classifier_forward.1']
    %8 = vsyncpa [#allocation3], 0
    // Predicated region
    $region2: #{geo_classifier_forward.1} parent=1 // pred_check
      _
    $region3: #{geo_classifier_forward.1} parent=1 // pred_check_branch
      %10 = sbr.rel (0) target = $region5
    $region4: #{geo_classifier_forward.1} parent=1 // pred_region
      _
    $region5: #{geo_classifier_forward.1} parent=1 // pred_fallthru
      _
    // Predicated region
    $region6: #{geo_classifier_forward.1} parent=1 // pred_check
      _
    $region7: #{geo_classifier_forward.1} parent=1 // pred_check_branch
      %12 = sbr.rel (0) target = $region9
    $region8: #{geo_classifier_forward.1} parent=1 // pred_region
      _
    $region9: #{geo_classifier_forward.1} parent=1 // pred_fallthru
      _
    // Predicated region
    $region10: #{geo_classifier_forward.1} parent=1 // pred_check
      _
    $region11: #{geo_classifier_forward.1} parent=1 // pred_check_branch
      %14 = sbr.rel (0) target = $region13
    $region12: #{geo_classifier_forward.1} parent=1 // pred_region
      _
    $region13: #{geo_classifier_forward.1} parent=1 // pred_fallthru
      _
    %v15 = vld [vmem:[%s0] sm:$0x3]
    %v16 = vmax.f32 %v15, 0.0
    %v17 = vpack.c.bf16 %v16, %v16
    %v18 = vld [vmem:[%s1] sm:$0xf]
    %v19 = vld [vmem:[%s1 + $0x4] sm:$0xf]
    %v20 = vld [vmem:[%s1 + $0x8] sm:$0xf]
    %v21 = vld [vmem:[%s1 + $0xc] sm:$0xf]
    %v22 = vld [vmem:[%s1 + $0x10] sm:$0xf]
    %v23 = vld [vmem:[%s1 + $0x14] sm:$0xf]
    %v24 = vld [vmem:[%s1 + $0x18] sm:$0xf]
    %v25 = vld [vmem:[%s1 + $0x1c] sm:$0xf]
    %v26 = vld [vmem:[%s1 + $0x20] sm:$0xf]
    %v27 = vld [vmem:[%s1 + $0x24] sm:$0xf]
    %v28 = vld [vmem:[%s1 + $0x28] sm:$0xf]
    %v29 = vld [vmem:[%s1 + $0x2c] sm:$0xf]
    %v30 = vld [vmem:[%s1 + $0x30] sm:$0xf]
    %v31 = vld [vmem:[%s1 + $0x34] sm:$0xf]
    %v32 = vld [vmem:[%s1 + $0x38] sm:$0xf]
    %v33 = vld [vmem:[%s1 + $0x3c] sm:$0xf]
    %v34 = vld [vmem:[%s2] sm:$0x1]
    %v36 = vperm.slane %v34, 0
    %v54 = vunpack.c.l.b16 %v18
    %v55 = vunpack.c.l.b16 %v19
    %v56 = vunpack.c.l.b16 %v20
    %v57 = vunpack.c.l.b16 %v21
    %v58 = vunpack.c.l.b16 %v22
    %v59 = vunpack.c.l.b16 %v23
    %v60 = vunpack.c.l.b16 %v24
    %v61 = vunpack.c.l.b16 %v25
    %v62 = vunpack.c.l.b16 %v26
    %v63 = vunpack.c.l.b16 %v27
    %v64 = vunpack.c.l.b16 %v28
    %v65 = vunpack.c.l.b16 %v29
    %v66 = vunpack.c.l.b16 %v30
    %v67 = vunpack.c.l.b16 %v31
    %v68 = vunpack.c.l.b16 %v32
    %v69 = vunpack.c.l.b16 %v33
    %v70 = vpack.c.b16 %v55, %v54
    %v71 = vpack.c.b16 %v57, %v56
    %v72 = vpack.c.b16 %v59, %v58
    %v73 = vpack.c.b16 %v61, %v60
    %v74 = vpack.c.b16 %v63, %v62
    %v75 = vpack.c.b16 %v65, %v64
    %v76 = vpack.c.b16 %v67, %v66
    %v77 = vpack.c.b16 %v69, %v68
    %86 = vmatpush.bf16.msra.mxu0 %v77
    %87 = vmatpush.bf16.msra.mxu0 %v76
    %88 = vmatpush.bf16.msra.mxu0 %v75
    %89 = vmatpush.bf16.msra.mxu0 %v74
    %90 = vmatpush.bf16.msra.mxu0 %v73
    %91 = vmatpush.bf16.msra.mxu0 %v72
    %92 = vmatpush.bf16.msra.mxu0 %v71
    %93 = vmatpush.bf16.msra.mxu0 %v70
    %94 = vmatmul.bf16.gmra.mxu0 %v17
    %v95 = vpop.f32.mrf.mxu0
    %v96 = vadd.f32 %v36, %v95
    %v97 = vpop.f32.mrf.mxu0
    %98 = vdwg.mxu0
    %99 = vst [vmem:[#allocation2] sm:$0x3] %v96
    // Predicated region
    $region14: #{geo_classifier_forward.1} parent=1 // pred_check
      _
    $region15: #{geo_classifier_forward.1} parent=1 // pred_check_branch
      %101 = sbr.rel (0) target = $region17
    $region16: #{geo_classifier_forward.1} parent=1 // pred_region
      %103 = vsyncadd [#allocation3], 0
      %s105 = sshll.u32 [#allocation2], 4
      %s106 = int_to_ptr.vmem [resolvable:$true] %s105
      %s107 = sshll.u32 %s3, 4
      %s108 = int_to_ptr.hbm [resolvable:$true] %s107
      %110 = dma.vmem_to_hbm [thread:$0]  %s106, 32, %s108, [#allocation3]
    $region17: #{geo_classifier_forward.1} parent=1 // pred_fallthru
      _
    // Predicated region
    $region18: #{geo_classifier_forward.1} parent=1 // pred_check
      _
    $region19: #{geo_classifier_forward.1} parent=1 // pred_check_branch
      %112 = sbr.rel (0) target = $region21
    $region20: #{geo_classifier_forward.1} parent=1 // pred_region
      %114 = dma.done [#allocation3], 32
    $region21: #{geo_classifier_forward.1} parent=1 // pred_fallthru
      _
    %115 = vsyncpa [#allocation3], 1

</llo_original>
